<compile_context>
chip_gen: v5e
topology: v5e:2x2
jax: 0.10.0
libtpu: 0.0.40
codegen_flags: <defaults>
</compile_context>

<pallas_src>
import jax
import jax.numpy as jnp
from jax.experimental import pallas as pl
from jax.experimental.pallas import tpu as pltpu

_LANE = 128
_SUBLANE = 8
_VMEM_BUDGET_BYTES = 40 * 1024 * 1024  # conservative vs v7x's 64 MiB physical


def _round_up(v, m):
    return ((v + m - 1) // m) * m


def _mlp_tanh_kernel(x_ref, w1_ref, b1_ref, w2_ref, b2_ref, o_ref):
    w1 = w1_ref[...]
    w2 = w2_ref[...]
    # Cast matmul operands to the weight dtype (bf16 weights -> bf16 MXU
    # path); accumulation is always f32 via preferred_element_type.
    x = x_ref[...].astype(w1.dtype)
    # Layer 1: Linear(d_in -> d_hid) + Tanh.  Bias add on the VPU and tanh on
    # the EUP, both in f32; the hidden activation never touches HBM.
    h = jnp.tanh(
        jnp.dot(x, w1, preferred_element_type=jnp.float32)
        + b1_ref[...].astype(jnp.float32))
    # Layer 2: Linear(d_hid -> d_out).
    y = (jnp.dot(h.astype(w2.dtype), w2, preferred_element_type=jnp.float32)
         + b2_ref[...].astype(jnp.float32))
    o_ref[...] = y.astype(o_ref.dtype)


def _footprint_bytes(tb, d_in, d_hid, d_out, x_bytes, w_bytes, o_bytes):
    """Per-grid-step VMEM estimate (I/O tiles and params double-buffered)."""
    x_tile = tb * d_in * x_bytes
    o_tile = tb * d_out * o_bytes
    params = (d_in * d_hid + d_hid + d_hid * d_out + d_out) * w_bytes
    temps = tb * (d_hid + d_out) * 4  # f32 compute temporaries
    return 2 * (x_tile + o_tile + params) + temps


def _pick_batch_tile(B, requested_tb, d_in, d_hid, d_out,
                     x_bytes, w_bytes, o_bytes):
    tb = max(_SUBLANE, min(_round_up(requested_tb, _SUBLANE),
                           _round_up(B, _SUBLANE)))
    # Keep >= 2 grid steps whenever the batch allows it so the "parallel"
    # axis can feed both v7x TensorCores (and fill/drain overlaps steps).
    if B > _SUBLANE:
        tb = min(tb, max(_SUBLANE, _round_up(pl.cdiv(B, 2), _SUBLANE)))
    # Shrink until the double-buffered footprint fits the VMEM budget
    # (v7x: 64 MiB physical vs 128 MiB on v5e/v6e).
    while (tb > _SUBLANE and
           _footprint_bytes(tb, d_in, d_hid, d_out, x_bytes, w_bytes, o_bytes)
           > _VMEM_BUDGET_BYTES):
        tb = max(_SUBLANE, _round_up(tb // 2, _SUBLANE))
    return tb


def mlp_tanh_forward(x, params, *, tb=1024, out_dtype=None):
    """Linear(d_in, d_in//2) -> Tanh -> Linear(d_in//2, d_out) on x[..., :]."""
    w1, b1, w2, b2 = params["w1"], params["b1"], params["w2"], params["b2"]
    d_in = x.shape[-1]
    d_hid = w1.shape[1]
    d_out = w2.shape[1]
    assert w1.shape == (d_in, d_hid)
    assert w2.shape == (d_hid, d_out)
    out_dtype = jnp.dtype(x.dtype if out_dtype is None else out_dtype)

    b1 = b1.reshape(1, d_hid)
    b2 = b2.reshape(1, d_out)

    lead = x.shape[:-1]
    x2 = x.reshape(-1, d_in)
    B = x2.shape[0]

    # Lane-dense output guard: pad the tiny, fetched-once layer-2 params so
    # the output block is a multiple of 128 lanes (unmasked `vst` stores).
    d_out_k = d_out if d_out % _LANE == 0 else _round_up(d_out, _LANE)
    if d_out_k != d_out:
        w2 = jnp.pad(w2, ((0, 0), (0, d_out_k - d_out)))
        b2 = jnp.pad(b2, ((0, 0), (0, d_out_k - d_out)))

    x_bytes = jnp.dtype(x2.dtype).itemsize
    w_bytes = jnp.dtype(w1.dtype).itemsize
    o_bytes = out_dtype.itemsize
    tb = _pick_batch_tile(B, tb, d_in, d_hid, d_out_k,
                          x_bytes, w_bytes, o_bytes)
    n_blocks = pl.cdiv(B, tb)

    footprint = _footprint_bytes(tb, d_in, d_hid, d_out_k,
                                 x_bytes, w_bytes, o_bytes)
    vmem_limit = int(min(64 * 1024 * 1024,
                         max(32 * 1024 * 1024, 2 * footprint)))

    param_bytes = (d_in * d_hid + d_hid + d_hid * d_out_k + d_out_k) * w_bytes
    cost = pl.CostEstimate(
        flops=2 * B * (d_in * d_hid + d_hid * d_out_k),
        transcendentals=B * d_hid,
        bytes_accessed=(B * d_in * x_bytes + B * d_out_k * o_bytes
                        + param_bytes),
    )

    def full(shape):
        return pl.BlockSpec(shape, lambda b: (0,) * len(shape))

    out = pl.pallas_call(
        _mlp_tanh_kernel,
        out_shape=jax.ShapeDtypeStruct((B, d_out_k), out_dtype),
        grid_spec=pltpu.PrefetchScalarGridSpec(
            num_scalar_prefetch=0,
            grid=(n_blocks,),
            in_specs=[
                pl.BlockSpec((tb, d_in), lambda b: (b, 0)),   # x batch tile
                full(w1.shape), full(b1.shape),               # layer-1 params
                full(w2.shape), full(b2.shape),               # layer-2 params
            ],
            out_specs=pl.BlockSpec((tb, d_out_k), lambda b: (b, 0)),
        ),
        compiler_params=pltpu.CompilerParams(
            dimension_semantics=("parallel",),
            vmem_limit_bytes=vmem_limit),
        cost_estimate=cost,
    )(x2, w1, b1, w2, b2)

    if d_out_k != d_out:
        out = out[:, :d_out]
    return out.reshape(*lead, d_out)


def ref_forward(x, params):
    """Pure-JAX reference mirroring the PyTorch forward."""
    h = jnp.tanh(x @ params["w1"] + params["b1"])
    return h @ params["w2"] + params["b2"]


if __name__ == "__main__":
    # Hidden = input_dim // 2 per the module.  Feature dims are lane-dense;
    # the batch is deliberately NOT a multiple of the tile (nor of 8) to
    # exercise the pad-free ragged edge block.
    D_IN = 256
    D_HID, D_OUT = D_IN // 2, 128

    key = jax.random.PRNGKey(0)
    kx, kx3, k1, k2, k3, k4 = jax.random.split(key, 6)
    n = lambda k, s: (0.1 * jax.random.normal(k, s)).astype(jnp.float32)
    params = {
        # Linear(D_IN, D_IN//2) -> Tanh -> Linear(D_IN//2, D_OUT)
        "w1": n(k1, (D_IN, D_HID)), "b1": n(k2, (1, D_HID)),
        "w2": n(k3, (D_HID, D_OUT)), "b2": n(k4, (1, D_OUT)),
        # Pass bf16 x / weights for the bf16 MXU path (f32 accumulation);
        # the demo keeps f32 for a tight tolerance vs the f32 reference.
    }

    # Case 1: ragged 2-D batch (500 rows -> two 256-row grid steps; the edge
    # block is handled in-kernel, no wrapper pad or output slice).
    x = n(kx, (500, D_IN))
    out = jax.block_until_ready(mlp_tanh_forward(x, params))
    ref = jax.block_until_ready(ref_forward(x, params))
    assert out.shape == ref.shape
    assert jnp.max(jnp.abs(out - ref)) < 1e-3, "2-D mismatch vs reference"

    # Case 2: 3-D input (leading dims flattened into the batch).
    x3 = n(kx3, (3, 50, D_IN))
    out3 = jax.block_until_ready(mlp_tanh_forward(x3, params))
    ref3 = jax.block_until_ready(ref_forward(x3, params))
    assert out3.shape == ref3.shape
    assert jnp.max(jnp.abs(out3 - ref3)) < 1e-3, "3-D mismatch vs reference"

    print("KERNEL_OK")
</pallas_src>

<mosaic_0001>
module attributes {stable_mosaic.version = 11 : i64} {
  func.func @_mlp_tanh_kernel(%arg0: i32, %arg1: memref<256x256xf32, #tpu.memory_space<vmem>>, %arg2: memref<256x128xf32, #tpu.memory_space<vmem>>, %arg3: memref<1x128xf32, #tpu.memory_space<vmem>>, %arg4: memref<128x128xf32, #tpu.memory_space<vmem>>, %arg5: memref<1x128xf32, #tpu.memory_space<vmem>>, %arg6: memref<256x128xf32, #tpu.memory_space<vmem>>) attributes {dimension_semantics = [#tpu.dimension_semantics<parallel>], iteration_bounds = array<i64: 2>, scalar_prefetch = 0 : i64, scratch_operands = 0 : i64, tpu.core_type = #tpu.core_type<tc>, window_params = [{transform_indices = @transform_0, window_bounds = array<i64: 256, 256>}, {pipeline_mode = #tpu.pipeline_mode<synchronous>, transform_indices = @transform_1, window_bounds = array<i64: 256, 128>}, {pipeline_mode = #tpu.pipeline_mode<synchronous>, transform_indices = @transform_2, window_bounds = array<i64: 1, 128>}, {pipeline_mode = #tpu.pipeline_mode<synchronous>, transform_indices = @transform_3, window_bounds = array<i64: 128, 128>}, {pipeline_mode = #tpu.pipeline_mode<synchronous>, transform_indices = @transform_4, window_bounds = array<i64: 1, 128>}, {transform_indices = @transform_5, window_bounds = array<i64: 256, 128>}]} {
    %c0 = arith.constant 0 : index
    %c0_0 = arith.constant 0 : index
    %0 = vector.load %arg2[%c0, %c0_0] : memref<256x128xf32, #tpu.memory_space<vmem>>, vector<256x128xf32>
    %c0_1 = arith.constant 0 : index
    %c0_2 = arith.constant 0 : index
    %1 = vector.load %arg4[%c0_1, %c0_2] : memref<128x128xf32, #tpu.memory_space<vmem>>, vector<128x128xf32>
    %c0_3 = arith.constant 0 : index
    %c0_4 = arith.constant 0 : index
    %2 = vector.load %arg1[%c0_3, %c0_4] : memref<256x256xf32, #tpu.memory_space<vmem>>, vector<256x256xf32>
    %cst = arith.constant dense<0.000000e+00> : vector<256x128xf32>
    %3 = tpu.matmul %2, %0, %cst {dimension_numbers = #tpu.dot_dimension_numbers<[1], [0], [0], [1], [0, 0, 1, 1], [], []>} : vector<256x256xf32>, vector<256x128xf32>, vector<256x128xf32> -> vector<256x128xf32>
    %c0_5 = arith.constant 0 : index
    %c0_6 = arith.constant 0 : index
    %4 = vector.load %arg3[%c0_5, %c0_6] : memref<1x128xf32, #tpu.memory_space<vmem>>, vector<1x128xf32>
    %5 = vector.broadcast %4 : vector<1x128xf32> to vector<256x128xf32>
    %6 = arith.addf %3, %5 : vector<256x128xf32>
    %7 = math.tanh %6 : vector<256x128xf32>
    %cst_7 = arith.constant dense<0.000000e+00> : vector<256x128xf32>
    %8 = tpu.matmul %7, %1, %cst_7 {dimension_numbers = #tpu.dot_dimension_numbers<[1], [0], [0], [1], [0, 0, 1, 1], [], []>} : vector<256x128xf32>, vector<128x128xf32>, vector<256x128xf32> -> vector<256x128xf32>
    %c0_8 = arith.constant 0 : index
    %c0_9 = arith.constant 0 : index
    %9 = vector.load %arg5[%c0_8, %c0_9] : memref<1x128xf32, #tpu.memory_space<vmem>>, vector<1x128xf32>
    %10 = vector.broadcast %9 : vector<1x128xf32> to vector<256x128xf32>
    %11 = arith.addf %8, %10 : vector<256x128xf32>
    %c0_10 = arith.constant 0 : index
    %c0_11 = arith.constant 0 : index
    %12 = vector.load %arg6[%c0_10, %c0_11] : memref<256x128xf32, #tpu.memory_space<vmem>>, vector<256x128xf32>
    tpu.vector_store %arg6[%c0_10, %c0_11], %11 {strides = array<i32>} : memref<256x128xf32, #tpu.memory_space<vmem>>, vector<256x128xf32>,
    return
  }
  func.func @transform_0(%arg0: i32) -> (i32, i32) {
    %c0_i32 = arith.constant 0 : i32
    %c0_i32_0 = arith.constant 0 : i32
    return %arg0, %c0_i32 : i32, i32
  }
  func.func @transform_1(%arg0: i32) -> (i32, i32) {
    %c0_i32 = arith.constant 0 : i32
    %c0_i32_0 = arith.constant 0 : i32
    %c0_i32_1 = arith.constant 0 : i32
    return %c0_i32, %c0_i32_0 : i32, i32
  }
  func.func @transform_2(%arg0: i32) -> (i32, i32) {
    %c0_i32 = arith.constant 0 : i32
    %c0_i32_0 = arith.constant 0 : i32
    %c0_i32_1 = arith.constant 0 : i32
    return %c0_i32, %c0_i32_0 : i32, i32
  }
  func.func @transform_3(%arg0: i32) -> (i32, i32) {
    %c0_i32 = arith.constant 0 : i32
    %c0_i32_0 = arith.constant 0 : i32
    %c0_i32_1 = arith.constant 0 : i32
    return %c0_i32, %c0_i32_0 : i32, i32
  }
  func.func @transform_4(%arg0: i32) -> (i32, i32) {
    %c0_i32 = arith.constant 0 : i32
    %c0_i32_0 = arith.constant 0 : i32
    %c0_i32_1 = arith.constant 0 : i32
    return %c0_i32, %c0_i32_0 : i32, i32
  }
  func.func @transform_5(%arg0: i32) -> (i32, i32) {
    %c0_i32 = arith.constant 0 : i32
    %c0_i32_0 = arith.constant 0 : i32
    return %arg0, %c0_i32 : i32, i32
  }
}

</mosaic_0001>

<llo_original>
// kernel: tpu_custom_call.1
$region0: #{tpu_custom_call.1}
  #allocation0 [shape = 'u32[]', space=smem, size = 0x4, offset = 0x4, fixed_abs, tag = 'smem constant byte address 0x4 - core index']
  #allocation1 [shape = 'u32[72,128]{1,0:T(1,128)}', space=vmem, size = 0x9000, scoped, tag = 'internal scratch']
  %s0 = inlined_call_operand.hbm [shape: f32[500,256], index: 0, kind: input, shape index: {}]
  %s1 = inlined_call_operand.hbm [shape: f32[256,128], index: 1, kind: input, shape index: {}]
  %s2 = inlined_call_operand.vmem [shape: f32[1,128], index: 2, kind: input, shape index: {}]
  %s3 = inlined_call_operand.hbm [shape: f32[128,128], index: 3, kind: input, shape index: {}]
  %s4 = inlined_call_operand.vmem [shape: f32[1,128], index: 4, kind: input, shape index: {}]
  %s5 = inlined_call_operand.hbm [shape: f32[500,128], index: 5, kind: output, shape index: {}]
  %s6 = sld [smem:[#allocation0]]
  $region65: #{tpu_custom_call.1} parent=0
    _
  %s8 = ssub.s32 1, %s6
  %s9 = scalar_select 0, %s8, %s6
  $region1: #{tpu_custom_call.1} parent=0
    #allocation2 [shape = 'u8[524288]{0}', space=vmem, size = 0x80000, scoped, tag = 'input window, operand 0']
    #allocation3 [shape = 's32[2]{0}', space=sflag, size = 0x8, scoped, tag = 'scoped memory for tpu_custom_call.1']
    #allocation4 [shape = 's32[2]{0}', space=sflag, size = 0x8, scoped, tag = 'scoped memory for tpu_custom_call.1']
    #allocation5 [shape = 'u8[131072]{0}', space=vmem, size = 0x20000, scoped, tag = 'input window, operand 1, single buffered']
    #allocation6 [shape = 's32[1]{0}', space=sflag, size = 0x4, scoped, tag = 'scoped memory for tpu_custom_call.1']
    #allocation7 [shape = 'u8[65536]{0}', space=vmem, size = 0x10000, scoped, tag = 'input window, operand 3, single buffered']
    #allocation8 [shape = 'u8[262144]{0}', space=vmem, size = 0x40000, scoped, tag = 'output window, operand 0']
    %10 = vsyncpa [#allocation3], 0
    %s11 = scalar_lea.sflag [#allocation3], 1
    %12 = vsyncpa %s11, 0
    %13 = vsyncpa [#allocation6], 0
    %14 = vsyncpa [#allocation4], 0
    %s15 = scalar_lea.sflag [#allocation4], 1
    %16 = vsyncpa %s15, 0
    loop: start=0, step=1, limit=4
    $region2: #{tpu_custom_call.1} parent=1 // loop_pre_header
      _
    $region3: #{tpu_custom_call.1} parent=1 // loop_header
      %s18 = sphi 0, %s22
      %p19 = scmp.ge.s32.totalorder %s18, 4
      %s28 = sphi 0, %s30
      %s31 = sphi 0, %s28
      %s32 = sphi 0, %s31
      %s48 = sphi 0, %s32
      %s52 = sphi 0, %s52
      %s54 = sphi 0, %s52
      %s55 = sphi 0, %s54
      %s69 = sphi 0, %s55
      %s73 = sphi 0, %s73
      %s75 = sphi 0, %s73
      %s76 = sphi 0, %s75
      %s90 = sphi 0, %s76
      %s94 = sphi 0, %s94
      %s96 = sphi 0, %s94
      %s97 = sphi 0, %s96
      %s111 = sphi 0, %s97
      %s115 = sphi 0, %s115
      %s117 = sphi 0, %s115
      %s118 = sphi 0, %s117
      %s132 = sphi 0, %s118
      %s138 = sphi 0, %s140
      %s141 = sphi 0, %s138
      %s142 = sphi 0, %s141
      %s158 = sphi 0, %s142
    $region4: #{tpu_custom_call.1} parent=1 // loop_header_branch
      %21 = sbr.rel (%p19) target = $region8
    $region5: #{tpu_custom_call.1} parent=1 // loop_body
      %s23 = ssub.s32 %s18, 1
      %s24 = ssub.s32 %s18, 2
      %s25 = sadd.s32 %s18, 1
      %s26 = ssub.s32 %s18, %s25
      %p27 = scmp.eq.s32.totalorder %s26, 0
      %s29 = sadd.s32 %s28, 1
      %s30 = scalar_select %p27, %s28, %s29
      %p33 = pneg %p27
      %p34 = scmp.eq.s32.totalorder %s18, 1
      %p35 = por %p33, %p34
      %p36 = scmp.ne.s32.totalorder %s28, %s31
      %p37 = scmp.eq.s32.totalorder %s18, 0
      %p38 = por %p36, %p37
      %p39 = scmp.ne.s32.totalorder %s28, %s31
      %p40 = scmp.eq.s32.totalorder %s23, 1
      %p41 = por %p39, %p40
      %p42 = scmp.ne.s32.totalorder %s31, %s32
      %p43 = scmp.eq.s32.totalorder %s23, 0
      %p44 = por %p42, %p43
      %p45 = scmp.ne.s32.totalorder %s31, %s32
      %p46 = scmp.eq.s32.totalorder %s24, 1
      %p47 = por %p45, %p46
      %p49 = scmp.ne.s32.totalorder %s32, %s48
      %p50 = scmp.eq.s32.totalorder %s24, 0
      %p51 = por %p49, %p50
      %s53 = sadd.s32 %s52, 1
      %p56 = scmp.eq.s32.totalorder %s18, 1
      %p57 = scmp.ne.s32.totalorder %s52, %s54
      %p58 = scmp.eq.s32.totalorder %s18, 0
      %p59 = por %p57, %p58
      %p60 = scmp.ne.s32.totalorder %s52, %s54
      %p61 = scmp.eq.s32.totalorder %s23, 1
      %p62 = por %p60, %p61
      %p63 = scmp.ne.s32.totalorder %s54, %s55
      %p64 = scmp.eq.s32.totalorder %s23, 0
      %p65 = por %p63, %p64
      %p66 = scmp.ne.s32.totalorder %s54, %s55
      %p67 = scmp.eq.s32.totalorder %s24, 1
      %p68 = por %p66, %p67
      %p70 = scmp.ne.s32.totalorder %s55, %s69
      %p71 = scmp.eq.s32.totalorder %s24, 0
      %p72 = por %p70, %p71
      %s74 = sadd.s32 %s73, 1
      %p77 = scmp.eq.s32.totalorder %s18, 1
      %p78 = scmp.ne.s32.totalorder %s73, %s75
      %p79 = scmp.eq.s32.totalorder %s18, 0
      %p80 = por %p78, %p79
      %p81 = scmp.ne.s32.totalorder %s73, %s75
      %p82 = scmp.eq.s32.totalorder %s23, 1
      %p83 = por %p81, %p82
      %p84 = scmp.ne.s32.totalorder %s75, %s76
      %p85 = scmp.eq.s32.totalorder %s23, 0
      %p86 = por %p84, %p85
      %p87 = scmp.ne.s32.totalorder %s75, %s76
      %p88 = scmp.eq.s32.totalorder %s24, 1
      %p89 = por %p87, %p88
      %p91 = scmp.ne.s32.totalorder %s76, %s90
      %p92 = scmp.eq.s32.totalorder %s24, 0
      %p93 = por %p91, %p92
      %s95 = sadd.s32 %s94, 1
      %p98 = scmp.eq.s32.totalorder %s18, 1
      %p99 = scmp.ne.s32.totalorder %s94, %s96
      %p100 = scmp.eq.s32.totalorder %s18, 0
      %p101 = por %p99, %p100
      %p102 = scmp.ne.s32.totalorder %s94, %s96
      %p103 = scmp.eq.s32.totalorder %s23, 1
      %p104 = por %p102, %p103
      %p105 = scmp.ne.s32.totalorder %s96, %s97
      %p106 = scmp.eq.s32.totalorder %s23, 0
      %p107 = por %p105, %p106
      %p108 = scmp.ne.s32.totalorder %s96, %s97
      %p109 = scmp.eq.s32.totalorder %s24, 1
      %p110 = por %p108, %p109
      %p112 = scmp.ne.s32.totalorder %s97, %s111
      %p113 = scmp.eq.s32.totalorder %s24, 0
      %p114 = por %p112, %p113
      %s116 = sadd.s32 %s115, 1
      %p119 = scmp.eq.s32.totalorder %s18, 1
      %p120 = scmp.ne.s32.totalorder %s115, %s117
      %p121 = scmp.eq.s32.totalorder %s18, 0
      %p122 = por %p120, %p121
      %p123 = scmp.ne.s32.totalorder %s115, %s117
      %p124 = scmp.eq.s32.totalorder %s23, 1
      %p125 = por %p123, %p124
      %p126 = scmp.ne.s32.totalorder %s117, %s118
      %p127 = scmp.eq.s32.totalorder %s23, 0
      %p128 = por %p126, %p127
      %p129 = scmp.ne.s32.totalorder %s117, %s118
      %p130 = scmp.eq.s32.totalorder %s24, 1
      %p131 = por %p129, %p130
      %p133 = scmp.ne.s32.totalorder %s118, %s132
      %p134 = scmp.eq.s32.totalorder %s24, 0
      %p135 = por %p133, %p134
      %s136 = ssub.s32 %s18, %s25
      %p137 = scmp.eq.s32.totalorder %s136, 0
      %s139 = sadd.s32 %s138, 1
      %s140 = scalar_select %p137, %s138, %s139
      %p143 = pneg %p137
      %p144 = scmp.eq.s32.totalorder %s18, 1
      %p145 = por %p143, %p144
      %p146 = scmp.ne.s32.totalorder %s138, %s141
      %p147 = scmp.eq.s32.totalorder %s18, 0
      %p148 = por %p146, %p147
      %p149 = scmp.ne.s32.totalorder %s138, %s141
      %p150 = scmp.eq.s32.totalorder %s23, 1
      %p151 = por %p149, %p150
      %p152 = scmp.ne.s32.totalorder %s141, %s142
      %p153 = scmp.eq.s32.totalorder %s23, 0
      %p154 = por %p152, %p153
      %p155 = scmp.ne.s32.totalorder %s141, %s142
      %p156 = scmp.eq.s32.totalorder %s24, 1
      %p157 = por %p155, %p156
      %p159 = scmp.ne.s32.totalorder %s142, %s158
      %p160 = scmp.eq.s32.totalorder %s24, 0
      %p161 = por %p159, %p160
      %p162 = scmp.le.s32.totalorder 1, %s18
      %p163 = scmp.lt.s32.totalorder %s18, 3
      %p164 = pnand %p162, %p163
      %p165 = pneg %p164
      // Predicated region
      $region9: #{tpu_custom_call.1} parent=5 // pred_check
        _
      $region10: #{tpu_custom_call.1} parent=5 // pred_check_branch
        %167 = sbr.rel (%p164) target = $region12
      $region11: #{tpu_custom_call.1} parent=5 // pred_region
        %s168 = ssub.s32 %s18, 1
        // Predicated region
        $region13: #{tpu_custom_call.1} parent=11 // pred_check
          %p169 = pneg %p65
        $region14: #{tpu_custom_call.1} parent=11 // pred_check_branch
          %171 = sbr.rel (%p169) target = $region16
        $region15: #{tpu_custom_call.1} parent=11 // pred_region
          %173 = vsyncadd [#allocation6], 0
          %s174 = sshll.u32 %s1, 4
          %s175 = int_to_ptr.hbm [resolvable:$true] %s174
          %s176 = sshll.u32 [#allocation5], 4
          %s177 = int_to_ptr.vmem [resolvable:$true] %s176
          %182 = dma.hbm_to_vmem [thread:$0]  %s175, 4096, %s177, [#allocation6], 128, 128, 8
        $region16: #{tpu_custom_call.1} parent=11 // pred_fallthru
          _
        // Predicated region
        $region17: #{tpu_custom_call.1} parent=11 // pred_check
          %p183 = pneg %p86
        $region18: #{tpu_custom_call.1} parent=11 // pred_check_branch
          %185 = sbr.rel (%p183) target = $region20
        $region19: #{tpu_custom_call.1} parent=11 // pred_region
          _
        $region20: #{tpu_custom_call.1} parent=11 // pred_fallthru
          _
        // Predicated region
        $region21: #{tpu_custom_call.1} parent=11 // pred_check
          %p186 = pneg %p107
        $region22: #{tpu_custom_call.1} parent=11 // pred_check_branch
          %188 = sbr.rel (%p186) target = $region24
        $region23: #{tpu_custom_call.1} parent=11 // pred_region
          %190 = vsyncadd [#allocation6], 0
          %s191 = sshll.u32 %s3, 4
          %s192 = int_to_ptr.hbm [resolvable:$true] %s191
          %s193 = sshll.u32 [#allocation7], 4
          %s194 = int_to_ptr.vmem [resolvable:$true] %s193
          %199 = dma.hbm_to_vmem [thread:$0]  %s192, 2048, %s194, [#allocation6], 128, 128, 8
        $region24: #{tpu_custom_call.1} parent=11 // pred_fallthru
          _
        // Predicated region
        $region25: #{tpu_custom_call.1} parent=11 // pred_check
          %p200 = pneg %p128
        $region26: #{tpu_custom_call.1} parent=11 // pred_check_branch
          %202 = sbr.rel (%p200) target = $region28
        $region27: #{tpu_custom_call.1} parent=11 // pred_region
          _
        $region28: #{tpu_custom_call.1} parent=11 // pred_fallthru
          _
      $region12: #{tpu_custom_call.1} parent=5 // pred_fallthru
        _
      %p203 = scmp.lt.s32.totalorder %s18, 2
      // Predicated region
      $region29: #{tpu_custom_call.1} parent=5 // pred_check
        %p204 = pneg %p203
      $region30: #{tpu_custom_call.1} parent=5 // pred_check_branch
        %206 = sbr.rel (%p204) target = $region32
      $region31: #{tpu_custom_call.1} parent=5 // pred_region
        // Predicated region
        $region33: #{tpu_custom_call.1} parent=31 // pred_check
          %p207 = pneg %p38
        $region34: #{tpu_custom_call.1} parent=31 // pred_check_branch
          %209 = sbr.rel (%p207) target = $region36
        $region35: #{tpu_custom_call.1} parent=31 // pred_region
          %s210 = sand.u32 %s28, 1
          %s211 = scalar_lea.sflag [#allocation3], %s210
          %s212 = sand.u32 %s28, 1
          %s213 = smul.addr %s212, 512
          %s214 = scalar_lea.vmem [#allocation2], %s213
          %s215 = smul.u32 32, %s18
          %s216 = ssub.s32 63, %s215
          %p217 = scmp.lt.s32.totalorder %s216, 32
          %s218 = scalar_select %p217, %s216, 32
          %s219 = smul.u32 8, %s218
          %s220 = smul.u32 %s219, 2
          %s221 = ssub.s32 512, %s220
          %s222 = sshll.u32 %s221, 4
          %223 = vsyncadd %s211, %s222
          %p224 = scmp.ne.s32.totalorder 0, %s220
          %s225 = smul.addr %s215, 2
          %s226 = smul.addr %s225, 8
          %s227 = scalar_lea.hbm %s0, %s226
          %s228 = smul.u32 16, %s218
          %s229 = sshll.u32 %s227, 4
          %s230 = int_to_ptr.hbm [resolvable:$true] %s229
          %s231 = sshll.u32 %s214, 4
          %s232 = int_to_ptr.vmem [resolvable:$true] %s231
          %s233 = sshll.u32 %s228, 4
          %237 = dma.hbm_to_vmem [thread:$0]  (%p224), %s230, %s233, %s232, %s211, 256, 256, 16
        $region36: #{tpu_custom_call.1} parent=31 // pred_fallthru
          _
      $region32: #{tpu_custom_call.1} parent=5 // pred_fallthru
        _
      %p238 = scmp.le.s32.totalorder 1, %s18
      %p239 = scmp.lt.s32.totalorder %s18, 3
      %p240 = pnand %p238, %p239
      %p241 = pneg %p240
      // Predicated region
      $region37: #{tpu_custom_call.1} parent=5 // pred_check
        _
      $region38: #{tpu_custom_call.1} parent=5 // pred_check_branch
        %243 = sbr.rel (%p240) target = $region40
      $region39: #{tpu_custom_call.1} parent=5 // pred_region
        %s244 = ssub.s32 %s18, 1
        %s245 = sand.u32 %s31, 1
        %s246 = scalar_lea.sflag [#allocation3], %s245
        %s247 = sand.u32 %s31, 1
        %s248 = smul.addr %s247, 512
        %s249 = scalar_lea.vmem [#allocation2], %s248
        // Predicated region
        $region41: #{tpu_custom_call.1} parent=39 // pred_check
          %p250 = pneg %p44
        $region42: #{tpu_custom_call.1} parent=39 // pred_check_branch
          %252 = sbr.rel (%p250) target = $region44
        $region43: #{tpu_custom_call.1} parent=39 // pred_region
          %254 = dma.done %s246, 8192
        $region44: #{tpu_custom_call.1} parent=39 // pred_fallthru
          _
        // Predicated region
        $region45: #{tpu_custom_call.1} parent=39 // pred_check
          %p255 = pneg %p65
        $region46: #{tpu_custom_call.1} parent=39 // pred_check_branch
          %257 = sbr.rel (%p255) target = $region48
        $region47: #{tpu_custom_call.1} parent=39 // pred_region
          %259 = dma.done [#allocation6], 4096
        $region48: #{tpu_custom_call.1} parent=39 // pred_fallthru
          _
        // Predicated region
        $region49: #{tpu_custom_call.1} parent=39 // pred_check
          %p260 = pneg %p107
        $region50: #{tpu_custom_call.1} parent=39 // pred_check_branch
          %262 = sbr.rel (%p260) target = $region52
        $region51: #{tpu_custom_call.1} parent=39 // pred_region
          %264 = dma.done [#allocation6], 2048
        $region52: #{tpu_custom_call.1} parent=39 // pred_fallthru
          _
        %s265 = sand.u32 %s31, 1
        %s266 = scalar_lea.sflag [#allocation3], %s265
        %s267 = sand.u32 %s31, 1
        %s268 = smul.addr %s267, 512
        %s269 = scalar_lea.vmem [#allocation2], %s268
        %p270 = pneg %p44
        %p271 = pneg %p41
        %p272 = pneg %p65
        %p273 = pneg %p62
        %p274 = pneg %p86
        %p275 = pneg %p83
        %p276 = pneg %p107
        %p277 = pneg %p104
        %p278 = pneg %p128
        %p279 = pneg %p125
        %p280 = pneg %p154
        %p281 = pneg %p151
        %s282 = sand.u32 %s141, 1
        %s283 = scalar_lea.sflag [#allocation4], %s282
        %s284 = sand.u32 %s141, 1
        %s285 = smul.addr %s284, 256
        %s286 = scalar_lea.vmem [#allocation8], %s285
        %s287 = smul.u32 32, %s23
        %s288 = ssub.s32 63, %s287
        %p289 = scmp.lt.s32.totalorder %s288, 32
        %s290 = scalar_select %p289, %s288, 32
        %s291 = smul.u32 8, %s290
        %s292 = smul.u32 %s291, 2
        %s293 = smul.u32 32, %s23
        %s294 = ssub.s32 63, %s293
        %p295 = scmp.lt.s32.totalorder %s294, 32
        %s296 = scalar_select %p295, %s294, 32
        %s297 = smul.u32 8, %s296
        %v298 = vld [vmem:[#allocation5] sm:$0xff]
        %v299 = vld [vmem:[#allocation5 + $0x8] sm:$0xff]
        %v300 = vld [vmem:[#allocation5 + $0x10] sm:$0xff]
        %v301 = vld [vmem:[#allocation5 + $0x18] sm:$0xff]
        %v302 = vld [vmem:[#allocation5 + $0x20] sm:$0xff]
        %v303 = vld [vmem:[#allocation5 + $0x28] sm:$0xff]
        %v304 = vld [vmem:[#allocation5 + $0x30] sm:$0xff]
        %v305 = vld [vmem:[#allocation5 + $0x38] sm:$0xff]
        %v306 = vld [vmem:[#allocation5 + $0x40] sm:$0xff]
        %v307 = vld [vmem:[#allocation5 + $0x48] sm:$0xff]
        %v308 = vld [vmem:[#allocation5 + $0x50] sm:$0xff]
        %v309 = vld [vmem:[#allocation5 + $0x58] sm:$0xff]
        %v310 = vld [vmem:[#allocation5 + $0x60] sm:$0xff]
        %v311 = vld [vmem:[#allocation5 + $0x68] sm:$0xff]
        %v312 = vld [vmem:[#allocation5 + $0x70] sm:$0xff]
        %v313 = vld [vmem:[#allocation5 + $0x78] sm:$0xff]
        %v314 = vld [vmem:[#allocation5 + $0x80] sm:$0xff]
        %v315 = vld [vmem:[#allocation5 + $0x88] sm:$0xff]
        %v316 = vld [vmem:[#allocation5 + $0x90] sm:$0xff]
        %v317 = vld [vmem:[#allocation5 + $0x98] sm:$0xff]
        %v318 = vld [vmem:[#allocation5 + $0xa0] sm:$0xff]
        %v319 = vld [vmem:[#allocation5 + $0xa8] sm:$0xff]
        %v320 = vld [vmem:[#allocation5 + $0xb0] sm:$0xff]
        %v321 = vld [vmem:[#allocation5 + $0xb8] sm:$0xff]
        %v322 = vld [vmem:[#allocation5 + $0xc0] sm:$0xff]
        %v323 = vld [vmem:[#allocation5 + $0xc8] sm:$0xff]
        %v324 = vld [vmem:[#allocation5 + $0xd0] sm:$0xff]
        %v325 = vld [vmem:[#allocation5 + $0xd8] sm:$0xff]
        %v326 = vld [vmem:[#allocation5 + $0xe0] sm:$0xff]
        %v327 = vld [vmem:[#allocation5 + $0xe8] sm:$0xff]
        %v328 = vld [vmem:[#allocation5 + $0xf0] sm:$0xff]
        %v329 = vld [vmem:[#allocation5 + $0xf8] sm:$0xff]
        %v330 = vld [vmem:[#allocation7] sm:$0xff]
        %v331 = vld [vmem:[#allocation7 + $0x8] sm:$0xff]
        %v332 = vld [vmem:[#allocation7 + $0x10] sm:$0xff]
        %v333 = vld [vmem:[#allocation7 + $0x18] sm:$0xff]
        %v334 = vld [vmem:[#allocation7 + $0x20] sm:$0xff]
        %v335 = vld [vmem:[#allocation7 + $0x28] sm:$0xff]
        %v336 = vld [vmem:[#allocation7 + $0x30] sm:$0xff]
        %v337 = vld [vmem:[#allocation7 + $0x38] sm:$0xff]
        %v338 = vld [vmem:[#allocation7 + $0x40] sm:$0xff]
        %v339 = vld [vmem:[#allocation7 + $0x48] sm:$0xff]
        %v340 = vld [vmem:[#allocation7 + $0x50] sm:$0xff]
        %v341 = vld [vmem:[#allocation7 + $0x58] sm:$0xff]
        %v342 = vld [vmem:[#allocation7 + $0x60] sm:$0xff]
        %v343 = vld [vmem:[#allocation7 + $0x68] sm:$0xff]
        %v344 = vld [vmem:[#allocation7 + $0x70] sm:$0xff]
        %v345 = vld [vmem:[#allocation7 + $0x78] sm:$0xff]
        %v346 = vld [vmem:[%s249] sm:$0xff]
        %v347 = vld [vmem:[%s249 + $0x8] sm:$0xff]
        %v348 = vld [vmem:[%s249 + $0x10] sm:$0xff]
        %v349 = vld [vmem:[%s249 + $0x18] sm:$0xff]
        %v350 = vld [vmem:[%s249 + $0x20] sm:$0xff]
        %v351 = vld [vmem:[%s249 + $0x28] sm:$0xff]
        %v352 = vld [vmem:[%s249 + $0x30] sm:$0xff]
        %v353 = vld [vmem:[%s249 + $0x38] sm:$0xff]
        %v354 = vld [vmem:[%s249 + $0x40] sm:$0xff]
        %v355 = vld [vmem:[%s249 + $0x48] sm:$0xff]
        %v356 = vld [vmem:[%s249 + $0x50] sm:$0xff]
        %v357 = vld [vmem:[%s249 + $0x58] sm:$0xff]
        %v358 = vld [vmem:[%s249 + $0x60] sm:$0xff]
        %v359 = vld [vmem:[%s249 + $0x68] sm:$0xff]
        %v360 = vld [vmem:[%s249 + $0x70] sm:$0xff]
        %v361 = vld [vmem:[%s249 + $0x78] sm:$0xff]
        %v362 = vld [vmem:[%s249 + $0x80] sm:$0xff]
        %v363 = vld [vmem:[%s249 + $0x88] sm:$0xff]
        %v364 = vld [vmem:[%s249 + $0x90] sm:$0xff]
        %v365 = vld [vmem:[%s249 + $0x98] sm:$0xff]
        %v366 = vld [vmem:[%s249 + $0xa0] sm:$0xff]
        %v367 = vld [vmem:[%s249 + $0xa8] sm:$0xff]
        %v368 = vld [vmem:[%s249 + $0xb0] sm:$0xff]
        %v369 = vld [vmem:[%s249 + $0xb8] sm:$0xff]
        %v370 = vld [vmem:[%s249 + $0xc0] sm:$0xff]
        %v371 = vld [vmem:[%s249 + $0xc8] sm:$0xff]
        %v372 = vld [vmem:[%s249 + $0xd0] sm:$0xff]
        %v373 = vld [vmem:[%s249 + $0xd8] sm:$0xff]
        %v374 = vld [vmem:[%s249 + $0xe0] sm:$0xff]
        %v375 = vld [vmem:[%s249 + $0xe8] sm:$0xff]
        %v376 = vld [vmem:[%s249 + $0xf0] sm:$0xff]
        %v377 = vld [vmem:[%s249 + $0xf8] sm:$0xff]
        %v378 = vld [vmem:[%s249 + $0x100] sm:$0xff]
        %v379 = vld [vmem:[%s249 + $0x108] sm:$0xff]
        %v380 = vld [vmem:[%s249 + $0x110] sm:$0xff]
        %v381 = vld [vmem:[%s249 + $0x118] sm:$0xff]
        %v382 = vld [vmem:[%s249 + $0x120] sm:$0xff]
        %v383 = vld [vmem:[%s249 + $0x128] sm:$0xff]
        %v384 = vld [vmem:[%s249 + $0x130] sm:$0xff]
        %v385 = vld [vmem:[%s249 + $0x138] sm:$0xff]
        %v386 = vld [vmem:[%s249 + $0x140] sm:$0xff]
        %v387 = vld [vmem:[%s249 + $0x148] sm:$0xff]
        %v388 = vld [vmem:[%s249 + $0x150] sm:$0xff]
        %v389 = vld [vmem:[%s249 + $0x158] sm:$0xff]
        %v390 = vld [vmem:[%s249 + $0x160] sm:$0xff]
        %v391 = vld [vmem:[%s249 + $0x168] sm:$0xff]
        %v392 = vld [vmem:[%s249 + $0x170] sm:$0xff]
        %v393 = vld [vmem:[%s249 + $0x178] sm:$0xff]
        %v394 = vld [vmem:[%s249 + $0x180] sm:$0xff]
        %v395 = vld [vmem:[%s249 + $0x188] sm:$0xff]
        %v396 = vld [vmem:[%s249 + $0x190] sm:$0xff]
        %v397 = vld [vmem:[%s249 + $0x198] sm:$0xff]
        %v398 = vld [vmem:[%s249 + $0x1a0] sm:$0xff]
        %v399 = vld [vmem:[%s249 + $0x1a8] sm:$0xff]
        %v400 = vld [vmem:[%s249 + $0x1b0] sm:$0xff]
        %v401 = vld [vmem:[%s249 + $0x1b8] sm:$0xff]
        %v402 = vld [vmem:[%s249 + $0x1c0] sm:$0xff]
        %v403 = vld [vmem:[%s249 + $0x1c8] sm:$0xff]
        %v404 = vld [vmem:[%s249 + $0x1d0] sm:$0xff]
        %v405 = vld [vmem:[%s249 + $0x1d8] sm:$0xff]
        %v406 = vld [vmem:[%s249 + $0x1e0] sm:$0xff]
        %v407 = vld [vmem:[%s249 + $0x1e8] sm:$0xff]
        %v408 = vld [vmem:[%s249 + $0x1f0] sm:$0xff]
        %v409 = vld [vmem:[%s249 + $0x1f8] sm:$0xff]
        %v410 = vld [vmem:[%s2] sm:$0x1]
        %v412 = vperm.slane %v410, 0
        %414 = vmatpush.msra.mxu0 %v313
        %415 = vmatpush.msra.mxu0 %v312
        %416 = vmatpush.msra.mxu0 %v311
        %417 = vmatpush.msra.mxu0 %v310
        %418 = vmatpush.msra.mxu0 %v309
        %419 = vmatpush.msra.mxu0 %v308
        %420 = vmatpush.msra.mxu0 %v307
        %421 = vmatpush.msra.mxu0 %v306
        %422 = vmatpush.msra.mxu0 %v305
        %423 = vmatpush.msra.mxu0 %v304
        %424 = vmatpush.msra.mxu0 %v303
        %425 = vmatpush.msra.mxu0 %v302
        %426 = vmatpush.msra.mxu0 %v301
        %427 = vmatpush.msra.mxu0 %v300
        %428 = vmatpush.msra.mxu0 %v299
        %429 = vmatpush.msra.mxu0 %v298
        %430 = vmatmul.f32.gmra.mxu0 %v346
        %v431 = vpop.f32.mrf.mxu0
        %v432 = vadd.f32 %v412, %v431
        %433 = vmatmul.f32.gmra.mxu0 %v348
        %v434 = vpop.f32.mrf.mxu0
        %v435 = vadd.f32 %v412, %v434
        %436 = vmatmul.f32.gmra.mxu0 %v350
        %v437 = vpop.f32.mrf.mxu0
        %v438 = vadd.f32 %v412, %v437
        %439 = vmatmul.f32.gmra.mxu0 %v352
        %v440 = vpop.f32.mrf.mxu0
        %v441 = vadd.f32 %v412, %v440
        %442 = vmatmul.f32.gmra.mxu0 %v354
        %v443 = vpop.f32.mrf.mxu0
        %v444 = vadd.f32 %v412, %v443
        %445 = vmatmul.f32.gmra.mxu0 %v356
        %v446 = vpop.f32.mrf.mxu0
        %v447 = vadd.f32 %v412, %v446
        %448 = vmatmul.f32.gmra.mxu0 %v358
        %v449 = vpop.f32.mrf.mxu0
        %v450 = vadd.f32 %v412, %v449
        %451 = vmatmul.f32.gmra.mxu0 %v360
        %v452 = vpop.f32.mrf.mxu0
        %v453 = vadd.f32 %v412, %v452
        %454 = vmatmul.f32.gmra.mxu0 %v362
        %v455 = vpop.f32.mrf.mxu0
        %v456 = vadd.f32 %v412, %v455
        %457 = vmatmul.f32.gmra.mxu0 %v364
        %v458 = vpop.f32.mrf.mxu0
        %v459 = vadd.f32 %v412, %v458
        %460 = vmatmul.f32.gmra.mxu0 %v366
        %v461 = vpop.f32.mrf.mxu0
        %v462 = vadd.f32 %v412, %v461
        %463 = vmatmul.f32.gmra.mxu0 %v368
        %v464 = vpop.f32.mrf.mxu0
        %v465 = vadd.f32 %v412, %v464
        %466 = vmatmul.f32.gmra.mxu0 %v370
        %v467 = vpop.f32.mrf.mxu0
        %v468 = vadd.f32 %v412, %v467
        %469 = vmatmul.f32.gmra.mxu0 %v372
        %v470 = vpop.f32.mrf.mxu0
        %v471 = vadd.f32 %v412, %v470
        %472 = vmatmul.f32.gmra.mxu0 %v374
        %v473 = vpop.f32.mrf.mxu0
        %v474 = vadd.f32 %v412, %v473
        %475 = vmatmul.f32.gmra.mxu0 %v376
        %v476 = vpop.f32.mrf.mxu0
        %v477 = vadd.f32 %v412, %v476
        %478 = vmatmul.f32.gmra.mxu0 %v378
        %v479 = vpop.f32.mrf.mxu0
        %v480 = vadd.f32 %v412, %v479
        %481 = vmatmul.f32.gmra.mxu0 %v380
        %v482 = vpop.f32.mrf.mxu0
        %v483 = vadd.f32 %v412, %v482
        %484 = vmatmul.f32.gmra.mxu0 %v382
        %v485 = vpop.f32.mrf.mxu0
        %v486 = vadd.f32 %v412, %v485
        %487 = vmatmul.f32.gmra.mxu0 %v384
        %v488 = vpop.f32.mrf.mxu0
        %v489 = vadd.f32 %v412, %v488
        %490 = vmatmul.f32.gmra.mxu0 %v386
        %v491 = vpop.f32.mrf.mxu0
        %v492 = vadd.f32 %v412, %v491
        %493 = vmatmul.f32.gmra.mxu0 %v388
        %v494 = vpop.f32.mrf.mxu0
        %v495 = vadd.f32 %v412, %v494
        %496 = vmatmul.f32.gmra.mxu0 %v390
        %v497 = vpop.f32.mrf.mxu0
        %v498 = vadd.f32 %v412, %v497
        %499 = vmatmul.f32.gmra.mxu0 %v392
        %v500 = vpop.f32.mrf.mxu0
        %v501 = vadd.f32 %v412, %v500
        %502 = vmatmul.f32.gmra.mxu0 %v394
        %v503 = vpop.f32.mrf.mxu0
        %v504 = vadd.f32 %v412, %v503
        %505 = vmatmul.f32.gmra.mxu0 %v396
        %v506 = vpop.f32.mrf.mxu0
        %v507 = vadd.f32 %v412, %v506
        %508 = vmatmul.f32.gmra.mxu0 %v398
        %v509 = vpop.f32.mrf.mxu0
        %v510 = vadd.f32 %v412, %v509
        %511 = vmatmul.f32.gmra.mxu0 %v400
        %v512 = vpop.f32.mrf.mxu0
        %v513 = vadd.f32 %v412, %v512
        %514 = vmatmul.f32.gmra.mxu0 %v402
        %v515 = vpop.f32.mrf.mxu0
        %v516 = vadd.f32 %v412, %v515
        %517 = vmatmul.f32.gmra.mxu0 %v404
        %v518 = vpop.f32.mrf.mxu0
        %v519 = vadd.f32 %v412, %v518
        %520 = vmatmul.f32.gmra.mxu0 %v406
        %v521 = vpop.f32.mrf.mxu0
        %v522 = vadd.f32 %v412, %v521
        %523 = vmatmul.f32.gmra.mxu0 %v408
        %v524 = vpop.f32.mrf.mxu0
        %v525 = vadd.f32 %v412, %v524
        %526 = vdwg.mxu0
        %527 = vmatpush.msra.mxu0 %v329
        %528 = vmatpush.msra.mxu0 %v328
        %529 = vmatpush.msra.mxu0 %v327
        %530 = vmatpush.msra.mxu0 %v326
        %531 = vmatpush.msra.mxu0 %v325
        %532 = vmatpush.msra.mxu0 %v324
        %533 = vmatpush.msra.mxu0 %v323
        %534 = vmatpush.msra.mxu0 %v322
        %535 = vmatpush.msra.mxu0 %v321
        %536 = vmatpush.msra.mxu0 %v320
        %537 = vmatpush.msra.mxu0 %v319
        %538 = vmatpush.msra.mxu0 %v318
        %539 = vmatpush.msra.mxu0 %v317
        %540 = vmatpush.msra.mxu0 %v316
        %541 = vmatpush.msra.mxu0 %v315
        %542 = vmatpush.msra.mxu0 %v314
        %543 = vmatmul.f32.gmra.mxu0 %v347
        %v544 = vpop.f32.mrf.mxu0
        %v545 = vadd.f32 %v432, %v544
        %546 = vmatmul.f32.gmra.mxu0 %v349
        %v547 = vpop.f32.mrf.mxu0
        %v548 = vadd.f32 %v435, %v547
        %549 = vmatmul.f32.gmra.mxu0 %v351
        %v550 = vpop.f32.mrf.mxu0
        %v551 = vadd.f32 %v438, %v550
        %552 = vmatmul.f32.gmra.mxu0 %v353
        %v553 = vpop.f32.mrf.mxu0
        %v554 = vadd.f32 %v441, %v553
        %555 = vmatmul.f32.gmra.mxu0 %v355
        %v556 = vpop.f32.mrf.mxu0
        %v557 = vadd.f32 %v444, %v556
        %558 = vmatmul.f32.gmra.mxu0 %v357
        %v559 = vpop.f32.mrf.mxu0
        %v560 = vadd.f32 %v447, %v559
        %561 = vmatmul.f32.gmra.mxu0 %v359
        %v562 = vpop.f32.mrf.mxu0
        %v563 = vadd.f32 %v450, %v562
        %564 = vmatmul.f32.gmra.mxu0 %v361
        %v565 = vpop.f32.mrf.mxu0
        %v566 = vadd.f32 %v453, %v565
        %567 = vmatmul.f32.gmra.mxu0 %v363
        %v568 = vpop.f32.mrf.mxu0
        %v569 = vadd.f32 %v456, %v568
        %570 = vmatmul.f32.gmra.mxu0 %v365
        %v571 = vpop.f32.mrf.mxu0
        %v572 = vadd.f32 %v459, %v571
        %573 = vmatmul.f32.gmra.mxu0 %v367
        %v574 = vpop.f32.mrf.mxu0
        %v575 = vadd.f32 %v462, %v574
        %576 = vmatmul.f32.gmra.mxu0 %v369
        %v577 = vpop.f32.mrf.mxu0
        %v578 = vadd.f32 %v465, %v577
        %579 = vmatmul.f32.gmra.mxu0 %v371
        %v580 = vpop.f32.mrf.mxu0
        %v581 = vadd.f32 %v468, %v580
        %582 = vmatmul.f32.gmra.mxu0 %v373
        %v583 = vpop.f32.mrf.mxu0
        %v584 = vadd.f32 %v471, %v583
        %585 = vmatmul.f32.gmra.mxu0 %v375
        %v586 = vpop.f32.mrf.mxu0
        %v587 = vadd.f32 %v474, %v586
        %588 = vmatmul.f32.gmra.mxu0 %v377
        %v589 = vpop.f32.mrf.mxu0
        %v590 = vadd.f32 %v477, %v589
        %591 = vmatmul.f32.gmra.mxu0 %v379
        %v592 = vpop.f32.mrf.mxu0
        %v593 = vadd.f32 %v480, %v592
        %594 = vmatmul.f32.gmra.mxu0 %v381
        %v595 = vpop.f32.mrf.mxu0
        %v596 = vadd.f32 %v483, %v595
        %597 = vmatmul.f32.gmra.mxu0 %v383
        %v598 = vpop.f32.mrf.mxu0
        %v599 = vadd.f32 %v486, %v598
        %600 = vmatmul.f32.gmra.mxu0 %v385
        %v601 = vpop.f32.mrf.mxu0
        %v602 = vadd.f32 %v489, %v601
        %603 = vmatmul.f32.gmra.mxu0 %v387
        %v604 = vpop.f32.mrf.mxu0
        %v605 = vadd.f32 %v492, %v604
        %606 = vmatmul.f32.gmra.mxu0 %v389
        %v607 = vpop.f32.mrf.mxu0
        %v608 = vadd.f32 %v495, %v607
        %609 = vmatmul.f32.gmra.mxu0 %v391
        %v610 = vpop.f32.mrf.mxu0
        %v611 = vadd.f32 %v498, %v610
        %612 = vmatmul.f32.gmra.mxu0 %v393
        %v613 = vpop.f32.mrf.mxu0
        %v614 = vadd.f32 %v501, %v613
        %615 = vmatmul.f32.gmra.mxu0 %v395
        %v616 = vpop.f32.mrf.mxu0
        %v617 = vadd.f32 %v504, %v616
        %618 = vmatmul.f32.gmra.mxu0 %v397
        %v619 = vpop.f32.mrf.mxu0
        %v620 = vadd.f32 %v507, %v619
        %621 = vmatmul.f32.gmra.mxu0 %v399
        %v622 = vpop.f32.mrf.mxu0
        %v623 = vadd.f32 %v510, %v622
        %624 = vmatmul.f32.gmra.mxu0 %v401
        %v625 = vpop.f32.mrf.mxu0
        %v626 = vadd.f32 %v513, %v625
        %627 = vmatmul.f32.gmra.mxu0 %v403
        %v628 = vpop.f32.mrf.mxu0
        %v629 = vadd.f32 %v516, %v628
        %630 = vmatmul.f32.gmra.mxu0 %v405
        %v631 = vpop.f32.mrf.mxu0
        %v632 = vadd.f32 %v519, %v631
        %633 = vmatmul.f32.gmra.mxu0 %v407
        %v634 = vpop.f32.mrf.mxu0
        %v635 = vadd.f32 %v522, %v634
        %636 = vmatmul.f32.gmra.mxu0 %v409
        %v637 = vpop.f32.mrf.mxu0
        %v638 = vadd.f32 %v525, %v637
        %639 = vdwg.mxu0
        %v640 = vtanh.pop %v545
        %v641 = vtanh.pop %v548
        %v642 = vtanh.pop %v551
        %v643 = vtanh.pop %v554
        %v644 = vtanh.pop %v557
        %v645 = vtanh.pop %v560
        %v646 = vtanh.pop %v563
        %v647 = vtanh.pop %v566
        %v648 = vtanh.pop %v569
        %v649 = vtanh.pop %v572
        %v650 = vtanh.pop %v575
        %v651 = vtanh.pop %v578
        %v652 = vtanh.pop %v581
        %v653 = vtanh.pop %v584
        %v654 = vtanh.pop %v587
        %v655 = vtanh.pop %v590
        %v656 = vtanh.pop %v593
        %v657 = vtanh.pop %v596
        %v658 = vtanh.pop %v599
        %v659 = vtanh.pop %v602
        %v660 = vtanh.pop %v605
        %v661 = vtanh.pop %v608
        %v662 = vtanh.pop %v611
        %v663 = vtanh.pop %v614
        %v664 = vtanh.pop %v617
        %v665 = vtanh.pop %v620
        %v666 = vtanh.pop %v623
        %v667 = vtanh.pop %v626
        %v668 = vtanh.pop %v629
        %v669 = vtanh.pop %v632
        %v670 = vtanh.pop %v635
        %v671 = vtanh.pop %v638
        %v672 = vld [vmem:[%s4] sm:$0x1]
        %v674 = vperm.slane %v672, 0
        %676 = vmatpush.msra.mxu0 %v345
        %677 = vmatpush.msra.mxu0 %v344
        %678 = vmatpush.msra.mxu0 %v343
        %679 = vmatpush.msra.mxu0 %v342
        %680 = vmatpush.msra.mxu0 %v341
        %681 = vmatpush.msra.mxu0 %v340
        %682 = vmatpush.msra.mxu0 %v339
        %683 = vmatpush.msra.mxu0 %v338
        %684 = vmatpush.msra.mxu0 %v337
        %685 = vmatpush.msra.mxu0 %v336
        %686 = vmatpush.msra.mxu0 %v335
        %687 = vmatpush.msra.mxu0 %v334
        %688 = vmatpush.msra.mxu0 %v333
        %689 = vmatpush.msra.mxu0 %v332
        %690 = vmatpush.msra.mxu0 %v331
        %691 = vmatpush.msra.mxu0 %v330
        %692 = vmatmul.f32.gmra.mxu0 %v640
        %v693 = vpop.f32.mrf.mxu0
        %v694 = vadd.f32 %v674, %v693
        %695 = vmatmul.f32.gmra.mxu0 %v641
        %v696 = vpop.f32.mrf.mxu0
        %v697 = vadd.f32 %v674, %v696
        %698 = vmatmul.f32.gmra.mxu0 %v642
        %v699 = vpop.f32.mrf.mxu0
        %v700 = vadd.f32 %v674, %v699
        %701 = vmatmul.f32.gmra.mxu0 %v643
        %v702 = vpop.f32.mrf.mxu0
        %v703 = vadd.f32 %v674, %v702
        %704 = vmatmul.f32.gmra.mxu0 %v644
        %v705 = vpop.f32.mrf.mxu0
        %v706 = vadd.f32 %v674, %v705
        %707 = vmatmul.f32.gmra.mxu0 %v645
        %v708 = vpop.f32.mrf.mxu0
        %v709 = vadd.f32 %v674, %v708
        %710 = vmatmul.f32.gmra.mxu0 %v646
        %v711 = vpop.f32.mrf.mxu0
        %v712 = vadd.f32 %v674, %v711
        %713 = vmatmul.f32.gmra.mxu0 %v647
        %v714 = vpop.f32.mrf.mxu0
        %v715 = vadd.f32 %v674, %v714
        %716 = vmatmul.f32.gmra.mxu0 %v648
        %v717 = vpop.f32.mrf.mxu0
        %v718 = vadd.f32 %v674, %v717
        %719 = vmatmul.f32.gmra.mxu0 %v649
        %v720 = vpop.f32.mrf.mxu0
        %v721 = vadd.f32 %v674, %v720
        %722 = vmatmul.f32.gmra.mxu0 %v650
        %v723 = vpop.f32.mrf.mxu0
        %v724 = vadd.f32 %v674, %v723
        %725 = vmatmul.f32.gmra.mxu0 %v651
        %v726 = vpop.f32.mrf.mxu0
        %v727 = vadd.f32 %v674, %v726
        %728 = vmatmul.f32.gmra.mxu0 %v652
        %v729 = vpop.f32.mrf.mxu0
        %v730 = vadd.f32 %v674, %v729
        %731 = vmatmul.f32.gmra.mxu0 %v653
        %v732 = vpop.f32.mrf.mxu0
        %v733 = vadd.f32 %v674, %v732
        %734 = vmatmul.f32.gmra.mxu0 %v654
        %v735 = vpop.f32.mrf.mxu0
        %v736 = vadd.f32 %v674, %v735
        %737 = vmatmul.f32.gmra.mxu0 %v655
        %v738 = vpop.f32.mrf.mxu0
        %v739 = vadd.f32 %v674, %v738
        %740 = vmatmul.f32.gmra.mxu0 %v656
        %v741 = vpop.f32.mrf.mxu0
        %v742 = vadd.f32 %v674, %v741
        %743 = vmatmul.f32.gmra.mxu0 %v657
        %v744 = vpop.f32.mrf.mxu0
        %v745 = vadd.f32 %v674, %v744
        %746 = vmatmul.f32.gmra.mxu0 %v658
        %v747 = vpop.f32.mrf.mxu0
        %v748 = vadd.f32 %v674, %v747
        %749 = vmatmul.f32.gmra.mxu0 %v659
        %v750 = vpop.f32.mrf.mxu0
        %v751 = vadd.f32 %v674, %v750
        %752 = vmatmul.f32.gmra.mxu0 %v660
        %v753 = vpop.f32.mrf.mxu0
        %v754 = vadd.f32 %v674, %v753
        %755 = vmatmul.f32.gmra.mxu0 %v661
        %v756 = vpop.f32.mrf.mxu0
        %v757 = vadd.f32 %v674, %v756
        %758 = vmatmul.f32.gmra.mxu0 %v662
        %v759 = vpop.f32.mrf.mxu0
        %v760 = vadd.f32 %v674, %v759
        %761 = vmatmul.f32.gmra.mxu0 %v663
        %v762 = vpop.f32.mrf.mxu0
        %v763 = vadd.f32 %v674, %v762
        %764 = vmatmul.f32.gmra.mxu0 %v664
        %v765 = vpop.f32.mrf.mxu0
        %v766 = vadd.f32 %v674, %v765
        %767 = vmatmul.f32.gmra.mxu0 %v665
        %v768 = vpop.f32.mrf.mxu0
        %v769 = vadd.f32 %v674, %v768
        %770 = vmatmul.f32.gmra.mxu0 %v666
        %v771 = vpop.f32.mrf.mxu0
        %v772 = vadd.f32 %v674, %v771
        %773 = vmatmul.f32.gmra.mxu0 %v667
        %v774 = vpop.f32.mrf.mxu0
        %v775 = vadd.f32 %v674, %v774
        %776 = vmatmul.f32.gmra.mxu0 %v668
        %v777 = vpop.f32.mrf.mxu0
        %v778 = vadd.f32 %v674, %v777
        %779 = vmatmul.f32.gmra.mxu0 %v669
        %v780 = vpop.f32.mrf.mxu0
        %v781 = vadd.f32 %v674, %v780
        %782 = vmatmul.f32.gmra.mxu0 %v670
        %v783 = vpop.f32.mrf.mxu0
        %v784 = vadd.f32 %v674, %v783
        %785 = vmatmul.f32.gmra.mxu0 %v671
        %v786 = vpop.f32.mrf.mxu0
        %v787 = vadd.f32 %v674, %v786
        %788 = vdwg.mxu0
        %789 = vst [vmem:[%s286] sm:$0xff] %v694
        %790 = vst [vmem:[%s286 + $0x8] sm:$0xff] %v697
        %791 = vst [vmem:[%s286 + $0x10] sm:$0xff] %v700
        %792 = vst [vmem:[%s286 + $0x18] sm:$0xff] %v703
        %793 = vst [vmem:[%s286 + $0x20] sm:$0xff] %v706
        %794 = vst [vmem:[%s286 + $0x28] sm:$0xff] %v709
        %795 = vst [vmem:[%s286 + $0x30] sm:$0xff] %v712
        %796 = vst [vmem:[%s286 + $0x38] sm:$0xff] %v715
        %797 = vst [vmem:[%s286 + $0x40] sm:$0xff] %v718
        %798 = vst [vmem:[%s286 + $0x48] sm:$0xff] %v721
        %799 = vst [vmem:[%s286 + $0x50] sm:$0xff] %v724
        %800 = vst [vmem:[%s286 + $0x58] sm:$0xff] %v727
        %801 = vst [vmem:[%s286 + $0x60] sm:$0xff] %v730
        %802 = vst [vmem:[%s286 + $0x68] sm:$0xff] %v733
        %803 = vst [vmem:[%s286 + $0x70] sm:$0xff] %v736
        %804 = vst [vmem:[%s286 + $0x78] sm:$0xff] %v739
        %805 = vst [vmem:[%s286 + $0x80] sm:$0xff] %v742
        %806 = vst [vmem:[%s286 + $0x88] sm:$0xff] %v745
        %807 = vst [vmem:[%s286 + $0x90] sm:$0xff] %v748
        %808 = vst [vmem:[%s286 + $0x98] sm:$0xff] %v751
        %809 = vst [vmem:[%s286 + $0xa0] sm:$0xff] %v754
        %810 = vst [vmem:[%s286 + $0xa8] sm:$0xff] %v757
        %811 = vst [vmem:[%s286 + $0xb0] sm:$0xff] %v760
        %812 = vst [vmem:[%s286 + $0xb8] sm:$0xff] %v763
        %813 = vst [vmem:[%s286 + $0xc0] sm:$0xff] %v766
        %814 = vst [vmem:[%s286 + $0xc8] sm:$0xff] %v769
        %815 = vst [vmem:[%s286 + $0xd0] sm:$0xff] %v772
        %816 = vst [vmem:[%s286 + $0xd8] sm:$0xff] %v775
        %817 = vst [vmem:[%s286 + $0xe0] sm:$0xff] %v778
        %818 = vst [vmem:[%s286 + $0xe8] sm:$0xff] %v781
        %819 = vst [vmem:[%s286 + $0xf0] sm:$0xff] %v784
        %820 = vst [vmem:[%s286 + $0xf8] sm:$0xff] %v787
        %s821 = sand.u32 %s141, 1
        %s822 = scalar_lea.sflag [#allocation4], %s821
        %s823 = sand.u32 %s141, 1
        %s824 = smul.addr %s823, 256
        %s825 = scalar_lea.vmem [#allocation8], %s824
        // Predicated region
        $region53: #{tpu_custom_call.1} parent=39 // pred_check
          %p826 = pneg %p151
        $region54: #{tpu_custom_call.1} parent=39 // pred_check_branch
          %828 = sbr.rel (%p826) target = $region56
        $region55: #{tpu_custom_call.1} parent=39 // pred_region
          %s829 = smul.u32 32, %s23
          %s830 = ssub.s32 63, %s829
          %p831 = scmp.lt.s32.totalorder %s830, 32
          %s832 = scalar_select %p831, %s830, 32
          %s833 = smul.u32 8, %s832
          %s834 = ssub.s32 256, %s833
          %s835 = sshll.u32 %s834, 4
          %836 = vsyncadd %s822, %s835
          %p837 = scmp.ne.s32.totalorder 0, %s833
          %s838 = smul.addr %s829, 8
          %s839 = scalar_lea.hbm %s5, %s838
          %s840 = smul.u32 8, %s832
          %s841 = sshll.u32 %s825, 4
          %s842 = int_to_ptr.vmem [resolvable:$true] %s841
          %s843 = sshll.u32 %s839, 4
          %s844 = int_to_ptr.hbm [resolvable:$true] %s843
          %s845 = sshll.u32 %s840, 4
          %849 = dma.vmem_to_hbm [thread:$0]  (%p837), %s842, %s845, %s844, %s822, 128, 128, 8
        $region56: #{tpu_custom_call.1} parent=39 // pred_fallthru
          _
      $region40: #{tpu_custom_call.1} parent=5 // pred_fallthru
        _
      %p850 = scmp.le.s32.totalorder 2, %s18
      // Predicated region
      $region57: #{tpu_custom_call.1} parent=5 // pred_check
        %p851 = pneg %p850
      $region58: #{tpu_custom_call.1} parent=5 // pred_check_branch
        %853 = sbr.rel (%p851) target = $region60
      $region59: #{tpu_custom_call.1} parent=5 // pred_region
        %s854 = ssub.s32 %s18, 2
        // Predicated region
        $region61: #{tpu_custom_call.1} parent=59 // pred_check
          %p855 = pneg %p157
        $region62: #{tpu_custom_call.1} parent=59 // pred_check_branch
          %857 = sbr.rel (%p855) target = $region64
        $region63: #{tpu_custom_call.1} parent=59 // pred_region
          %s858 = sand.u32 %s142, 1
          %s859 = scalar_lea.sflag [#allocation4], %s858
          %s860 = sand.u32 %s142, 1
          %s861 = smul.addr %s860, 256
          %s862 = scalar_lea.vmem [#allocation8], %s861
          %864 = dma.done %s859, 4096
        $region64: #{tpu_custom_call.1} parent=59 // pred_fallthru
          _
      $region60: #{tpu_custom_call.1} parent=5 // pred_fallthru
        _
    $region6: #{tpu_custom_call.1} parent=1 // loop_footer
      %s22 = sadd.s32 1, %s18
    $region7: #{tpu_custom_call.1} parent=1 // loop_footer_branch
      %17 = sbr.rel target = $region3
    $region8: #{tpu_custom_call.1} parent=1 // loop_exit
      _
    %865 = vsyncpa [#allocation3], 1
    %s866 = scalar_lea.sflag [#allocation3], 1
    %867 = vsyncpa %s866, 1
    %868 = vsyncpa [#allocation6], 1
    %869 = vsyncpa [#allocation4], 1
    %s870 = scalar_lea.sflag [#allocation4], 1
    %871 = vsyncpa %s870, 1

</llo_original>
